<compile_context>
chip_gen: v7x
topology: tpu7x:2x2x1
jax: 0.10.0
libtpu: 0.0.40
codegen_flags: <defaults>
</compile_context>

<pallas_src>
import jax
import jax.numpy as jnp
from jax.experimental import pallas as pl
from jax.experimental.pallas import tpu as pltpu


def _round_up(x: int, m: int) -> int:
    return ((x + m - 1) // m) * m


def _choose_block_b(B: int, state_dim: int, block_b=None) -> int:
    """Pick the batch tile size (rows per grid step)."""
    if block_b is None:
        # VMEM budget per row (f32), counting 128-lane padding of narrow minor
        # dims: 2x double-buffered input tile, 2x double-buffered output tile,
        # and the two (TB, 32) hidden activations.
        lanes_in = _round_up(state_dim, 128)
        per_row_bytes = 4 * (2 * lanes_in + 4 * 128)
        block_b = (8 * 1024 * 1024) // per_row_bytes        # ~8 MiB working set
        if B > 256:
            # Keep >= 2 grid steps so the "parallel" batch axis can be sharded
            # across both TensorCores on multi-core chips (v7x).
            block_b = min(block_b, -(-B // 2))
    block_b = int(max(8, min(8192, min(block_b, _round_up(B, 8)))))
    return _round_up(block_b, 8)


def _critic_kernel(x_ref, w1_ref, b1_ref, w2_ref, b2_ref, w3_ref, b3_ref, o_ref):
    """Fused batch-major 3-layer MLP: relu(x@W1^T+b1) -> relu(.@W2^T+b2) -> .@W3^T+b3."""
    x = x_ref[...]                                                     # (TB, S)

    h = jnp.dot(x, w1_ref[...], preferred_element_type=jnp.float32)   # (TB, 32)
    h = jnp.maximum(h + b1_ref[...], 0.0)

    h = jnp.dot(h, w2_ref[...], preferred_element_type=jnp.float32)   # (TB, 32)
    h = jnp.maximum(h + b2_ref[...], 0.0)

    v = jnp.dot(h, w3_ref[...], preferred_element_type=jnp.float32)   # (TB, 1)
    o_ref[...] = (v + b3_ref[...]).astype(o_ref.dtype)


def critic_forward(state, params, *, block_b=None):
    """state: (B, state_dim) f32.  Returns (B, 1) f32, matching Critic.forward."""
    w1, b1, w2, b2, w3, b3 = params            # PyTorch layout: W (out, in), b (out,)
    B, state_dim = state.shape
    hidden = w1.shape[0]

    TB = _choose_block_b(B, state_dim, block_b)
    grid = (pl.cdiv(B, TB),)                   # ragged tail handled by Pallas masking

    # Tiny weight transposes / bias reshapes (<= 32x32, negligible cost).
    w1t = w1.T                                 # (state_dim, hidden)
    w2t = w2.T                                 # (hidden, hidden)
    w3t = w3.T                                 # (hidden, 1)
    b1r = b1.reshape(1, hidden)
    b2r = b2.reshape(1, hidden)
    b3r = b3.reshape(1, 1)

    flops = 2 * B * (state_dim * hidden + hidden * hidden + hidden)
    bytes_accessed = 4 * (
        B * (state_dim + 1)
        + w1.size + w2.size + w3.size + b1.size + b2.size + b3.size
    )

    out = pl.pallas_call(
        _critic_kernel,
        out_shape=jax.ShapeDtypeStruct((B, 1), jnp.float32),
        grid=grid,
        in_specs=[
            # batch-tiled input; weights/biases resident across all grid steps
            pl.BlockSpec((TB, state_dim), lambda i: (i, 0)),
            pl.BlockSpec((state_dim, hidden), lambda i: (0, 0)),
            pl.BlockSpec((1, hidden), lambda i: (0, 0)),
            pl.BlockSpec((hidden, hidden), lambda i: (0, 0)),
            pl.BlockSpec((1, hidden), lambda i: (0, 0)),
            pl.BlockSpec((hidden, 1), lambda i: (0, 0)),
            pl.BlockSpec((1, 1), lambda i: (0, 0)),
        ],
        out_specs=pl.BlockSpec((TB, 1), lambda i: (i, 0)),
        compiler_params=pltpu.CompilerParams(
            dimension_semantics=("parallel",),
            vmem_limit_bytes=32 * 1024 * 1024,
        ),
        cost_estimate=pl.CostEstimate(
            flops=flops, transcendentals=0, bytes_accessed=bytes_accessed
        ),
    )(state, w1t, b1r, w2t, b2r, w3t, b3r)

    return out


def init_critic_params(key, state_dim, hidden=32):
    """Deterministic synthetic init (Kaiming-uniform-ish, like nn.Linear)."""
    ks = jax.random.split(key, 6)

    def linear(kw, kb, fan_in, fan_out):
        bound = 1.0 / jnp.sqrt(jnp.float32(fan_in))
        w = jax.random.uniform(kw, (fan_out, fan_in), jnp.float32, -bound, bound)
        b = jax.random.uniform(kb, (fan_out,), jnp.float32, -bound, bound)
        return w, b

    w1, b1 = linear(ks[0], ks[1], state_dim, hidden)
    w2, b2 = linear(ks[2], ks[3], hidden, hidden)
    w3, b3 = linear(ks[4], ks[5], hidden, 1)
    return (w1, b1, w2, b2, w3, b3)


def critic_ref(state, params):
    """Pure-JAX reference (mirrors the PyTorch forward exactly)."""
    w1, b1, w2, b2, w3, b3 = params
    v = jnp.maximum(state @ w1.T + b1, 0.0)
    v = jnp.maximum(v @ w2.T + b2, 0.0)
    return v @ w3.T + b3


if __name__ == "__main__":
    key = jax.random.PRNGKey(0)
    k_param, k_state = jax.random.split(key)

    batch, state_dim = 8, 4  # small shapes consistent with the module
    params = init_critic_params(k_param, state_dim)
    state = jax.random.normal(k_state, (batch, state_dim), jnp.float32)

    out = jax.block_until_ready(critic_forward(state, params))
    expected = critic_ref(state, params)
    assert out.shape == (batch, 1), out.shape
    assert jnp.allclose(out, expected, atol=1e-5, rtol=1e-5), (
        "mismatch vs reference")

    # Larger, non-tile-multiple batch: multi-step grid + masked ragged tail.
    big_state = jax.random.normal(jax.random.PRNGKey(1), (300, state_dim),
                                  jnp.float32)
    big_out = jax.block_until_ready(critic_forward(big_state, params,
                                                   block_b=128))
    assert big_out.shape == (300, 1)
    assert jnp.allclose(big_out, critic_ref(big_state, params),
                        atol=1e-5, rtol=1e-5), "mismatch vs reference (big)"

    # Default (auto) tile selection on the larger batch as well.
    big_out2 = jax.block_until_ready(critic_forward(big_state, params))
    assert jnp.allclose(big_out2, critic_ref(big_state, params),
                        atol=1e-5, rtol=1e-5), "mismatch vs reference (auto TB)"

    print("KERNEL_OK")
</pallas_src>

<mosaic_0001>
module attributes {stable_mosaic.version = 11 : i64} {
  func.func @_critic_kernel(%arg0: i32, %arg1: memref<8x4xf32, #tpu.memory_space<vmem>>, %arg2: memref<4x32xf32, #tpu.memory_space<vmem>>, %arg3: memref<1x32xf32, #tpu.memory_space<vmem>>, %arg4: memref<32x32xf32, #tpu.memory_space<vmem>>, %arg5: memref<1x32xf32, #tpu.memory_space<vmem>>, %arg6: memref<32x1xf32, #tpu.memory_space<vmem>>, %arg7: memref<1x1xf32, #tpu.memory_space<vmem>>, %arg8: memref<8x1xf32, #tpu.memory_space<vmem>>) attributes {dimension_semantics = [#tpu.dimension_semantics<parallel>], iteration_bounds = array<i64: 1>, scalar_prefetch = 0 : i64, scratch_operands = 0 : i64, tpu.core_type = #tpu.core_type<tc>, window_params = [{transform_indices = @transform_0, window_bounds = array<i64: 8, 4>}, {pipeline_mode = #tpu.pipeline_mode<synchronous>, transform_indices = @transform_1, window_bounds = array<i64: 4, 32>}, {pipeline_mode = #tpu.pipeline_mode<synchronous>, transform_indices = @transform_2, window_bounds = array<i64: 1, 32>}, {pipeline_mode = #tpu.pipeline_mode<synchronous>, transform_indices = @transform_3, window_bounds = array<i64: 32, 32>}, {pipeline_mode = #tpu.pipeline_mode<synchronous>, transform_indices = @transform_4, window_bounds = array<i64: 1, 32>}, {pipeline_mode = #tpu.pipeline_mode<synchronous>, transform_indices = @transform_5, window_bounds = array<i64: 32, 1>}, {pipeline_mode = #tpu.pipeline_mode<synchronous>, transform_indices = @transform_6, window_bounds = array<i64: 1, 1>}, {transform_indices = @transform_7, window_bounds = array<i64: 8, 1>}]} {
    %c0 = arith.constant 0 : index
    %c0_0 = arith.constant 0 : index
    %0 = vector.load %arg1[%c0, %c0_0] : memref<8x4xf32, #tpu.memory_space<vmem>>, vector<8x4xf32>
    %c0_1 = arith.constant 0 : index
    %c0_2 = arith.constant 0 : index
    %1 = vector.load %arg2[%c0_1, %c0_2] : memref<4x32xf32, #tpu.memory_space<vmem>>, vector<4x32xf32>
    %cst = arith.constant dense<0.000000e+00> : vector<8x32xf32>
    %2 = tpu.matmul %0, %1, %cst {dimension_numbers = #tpu.dot_dimension_numbers<[1], [0], [0], [1], [0, 0, 1, 1], [], []>} : vector<8x4xf32>, vector<4x32xf32>, vector<8x32xf32> -> vector<8x32xf32>
    %c0_3 = arith.constant 0 : index
    %c0_4 = arith.constant 0 : index
    %3 = vector.load %arg3[%c0_3, %c0_4] : memref<1x32xf32, #tpu.memory_space<vmem>>, vector<1x32xf32>
    %4 = vector.broadcast %3 : vector<1x32xf32> to vector<8x32xf32>
    %5 = arith.addf %2, %4 : vector<8x32xf32>
    %cst_5 = arith.constant 0.000000e+00 : f32
    %6 = vector.broadcast %cst_5 : f32 to vector<8x32xf32>
    %7 = arith.maximumf %5, %6 : vector<8x32xf32>
    %c0_6 = arith.constant 0 : index
    %c0_7 = arith.constant 0 : index
    %8 = vector.load %arg4[%c0_6, %c0_7] : memref<32x32xf32, #tpu.memory_space<vmem>>, vector<32x32xf32>
    %cst_8 = arith.constant dense<0.000000e+00> : vector<8x32xf32>
    %9 = tpu.matmul %7, %8, %cst_8 {dimension_numbers = #tpu.dot_dimension_numbers<[1], [0], [0], [1], [0, 0, 1, 1], [], []>} : vector<8x32xf32>, vector<32x32xf32>, vector<8x32xf32> -> vector<8x32xf32>
    %c0_9 = arith.constant 0 : index
    %c0_10 = arith.constant 0 : index
    %10 = vector.load %arg5[%c0_9, %c0_10] : memref<1x32xf32, #tpu.memory_space<vmem>>, vector<1x32xf32>
    %11 = vector.broadcast %10 : vector<1x32xf32> to vector<8x32xf32>
    %12 = arith.addf %9, %11 : vector<8x32xf32>
    %cst_11 = arith.constant 0.000000e+00 : f32
    %13 = vector.broadcast %cst_11 : f32 to vector<8x32xf32>
    %14 = arith.maximumf %12, %13 : vector<8x32xf32>
    %c0_12 = arith.constant 0 : index
    %c0_13 = arith.constant 0 : index
    %15 = vector.load %arg6[%c0_12, %c0_13] : memref<32x1xf32, #tpu.memory_space<vmem>>, vector<32x1xf32>
    %cst_14 = arith.constant dense<0.000000e+00> : vector<8x1xf32>
    %16 = tpu.matmul %14, %15, %cst_14 {dimension_numbers = #tpu.dot_dimension_numbers<[1], [0], [0], [1], [0, 0, 1, 1], [], []>} : vector<8x32xf32>, vector<32x1xf32>, vector<8x1xf32> -> vector<8x1xf32>
    %c0_15 = arith.constant 0 : index
    %c0_16 = arith.constant 0 : index
    %17 = vector.load %arg7[%c0_15, %c0_16] : memref<1x1xf32, #tpu.memory_space<vmem>>, vector<1x1xf32>
    %18 = vector.broadcast %17 : vector<1x1xf32> to vector<8x1xf32>
    %19 = arith.addf %16, %18 : vector<8x1xf32>
    %c0_17 = arith.constant 0 : index
    %c0_18 = arith.constant 0 : index
    %20 = vector.load %arg8[%c0_17, %c0_18] : memref<8x1xf32, #tpu.memory_space<vmem>>, vector<8x1xf32>
    tpu.vector_store %arg8[%c0_17, %c0_18], %19 {strides = array<i32>} : memref<8x1xf32, #tpu.memory_space<vmem>>, vector<8x1xf32>,
    return
  }
  func.func @transform_0(%arg0: i32) -> (i32, i32) {
    %c0_i32 = arith.constant 0 : i32
    %c0_i32_0 = arith.constant 0 : i32
    return %arg0, %c0_i32 : i32, i32
  }
  func.func @transform_1(%arg0: i32) -> (i32, i32) {
    %c0_i32 = arith.constant 0 : i32
    %c0_i32_0 = arith.constant 0 : i32
    %c0_i32_1 = arith.constant 0 : i32
    return %c0_i32, %c0_i32_0 : i32, i32
  }
  func.func @transform_2(%arg0: i32) -> (i32, i32) {
    %c0_i32 = arith.constant 0 : i32
    %c0_i32_0 = arith.constant 0 : i32
    %c0_i32_1 = arith.constant 0 : i32
    return %c0_i32, %c0_i32_0 : i32, i32
  }
  func.func @transform_3(%arg0: i32) -> (i32, i32) {
    %c0_i32 = arith.constant 0 : i32
    %c0_i32_0 = arith.constant 0 : i32
    %c0_i32_1 = arith.constant 0 : i32
    return %c0_i32, %c0_i32_0 : i32, i32
  }
  func.func @transform_4(%arg0: i32) -> (i32, i32) {
    %c0_i32 = arith.constant 0 : i32
    %c0_i32_0 = arith.constant 0 : i32
    %c0_i32_1 = arith.constant 0 : i32
    return %c0_i32, %c0_i32_0 : i32, i32
  }
  func.func @transform_5(%arg0: i32) -> (i32, i32) {
    %c0_i32 = arith.constant 0 : i32
    %c0_i32_0 = arith.constant 0 : i32
    %c0_i32_1 = arith.constant 0 : i32
    return %c0_i32, %c0_i32_0 : i32, i32
  }
  func.func @transform_6(%arg0: i32) -> (i32, i32) {
    %c0_i32 = arith.constant 0 : i32
    %c0_i32_0 = arith.constant 0 : i32
    %c0_i32_1 = arith.constant 0 : i32
    return %c0_i32, %c0_i32_0 : i32, i32
  }
  func.func @transform_7(%arg0: i32) -> (i32, i32) {
    %c0_i32 = arith.constant 0 : i32
    %c0_i32_0 = arith.constant 0 : i32
    return %arg0, %c0_i32 : i32, i32
  }
}

</mosaic_0001>

<llo_original>
// kernel: tpu_custom_call.1
$region0: #{tpu_custom_call.1}
  #allocation0 [shape = 'u32[]', space=smem, size = 0x4, offset = 0x4, fixed_abs, tag = 'smem constant byte address 0x4 - core index']
  #allocation1 [shape = 'u32[144,128]{1,0:T(1,128)}', space=vmem, size = 0x12000, scoped, tag = 'internal scratch']
  #allocation2 [shape = 'f32[1,1]{1,0:T(1,128)S(1)}', space=vmem, size = 0x200, scoped, tag = 'scoped memory for tpu_custom_call.1']
  %s0 = inlined_call_operand.vmem [shape: f32[8,4], index: 0, kind: input, shape index: {}]
  %s1 = inlined_call_operand.vmem [shape: f32[4,32], index: 1, kind: input, shape index: {}]
  %s2 = inlined_call_operand.vmem [shape: f32[1,32], index: 2, kind: input, shape index: {}]
  %s3 = inlined_call_operand.vmem [shape: f32[32,32], index: 3, kind: input, shape index: {}]
  %s4 = inlined_call_operand.vmem [shape: f32[1,32], index: 4, kind: input, shape index: {}]
  %s5 = inlined_call_operand.vmem [shape: f32[32,1], index: 5, kind: input, shape index: {}]
  %s6 = inlined_call_operand.<no memory space> [shape: f32[1,1], index: 6, kind: input, shape index: {}]
  %s7 = inlined_call_operand.vmem [shape: f32[8,1], index: 7, kind: output, shape index: {}]
  %s8 = sld [smem:[#allocation0]]
  $region38: #{tpu_custom_call.1} parent=0
    _
  %s10 = ssub.s32 1, %s8
  %s11 = scalar_select 0, %s10, %s8
  %v12 = vstv %s6
  %13 = vst [vmem:[#allocation2] sm:$0x1] %v12
  // Predicated region
  $region2: #{tpu_custom_call.1} parent=0 // pred_check
    _
  $region3: #{tpu_custom_call.1} parent=0 // pred_check_branch
    %15 = sbr.rel (0) target = $region5
  $region4: #{tpu_custom_call.1} parent=0 // pred_region
    _
  $region5: #{tpu_custom_call.1} parent=0 // pred_fallthru
    _
  // Predicated region
  $region6: #{tpu_custom_call.1} parent=0 // pred_check
    _
  $region7: #{tpu_custom_call.1} parent=0 // pred_check_branch
    %17 = sbr.rel (0) target = $region9
  $region8: #{tpu_custom_call.1} parent=0 // pred_region
    _
  $region9: #{tpu_custom_call.1} parent=0 // pred_fallthru
    _
  // Predicated region
  $region10: #{tpu_custom_call.1} parent=0 // pred_check
    _
  $region11: #{tpu_custom_call.1} parent=0 // pred_check_branch
    %19 = sbr.rel (0) target = $region13
  $region12: #{tpu_custom_call.1} parent=0 // pred_region
    _
  $region13: #{tpu_custom_call.1} parent=0 // pred_fallthru
    _
  // Predicated region
  $region14: #{tpu_custom_call.1} parent=0 // pred_check
    _
  $region15: #{tpu_custom_call.1} parent=0 // pred_check_branch
    %21 = sbr.rel (0) target = $region17
  $region16: #{tpu_custom_call.1} parent=0 // pred_region
    _
  $region17: #{tpu_custom_call.1} parent=0 // pred_fallthru
    _
  // Predicated region
  $region18: #{tpu_custom_call.1} parent=0 // pred_check
    _
  $region19: #{tpu_custom_call.1} parent=0 // pred_check_branch
    %23 = sbr.rel (0) target = $region21
  $region20: #{tpu_custom_call.1} parent=0 // pred_region
    _
  $region21: #{tpu_custom_call.1} parent=0 // pred_fallthru
    _
  // Predicated region
  $region22: #{tpu_custom_call.1} parent=0 // pred_check
    _
  $region23: #{tpu_custom_call.1} parent=0 // pred_check_branch
    %25 = sbr.rel (0) target = $region25
  $region24: #{tpu_custom_call.1} parent=0 // pred_region
    _
  $region25: #{tpu_custom_call.1} parent=0 // pred_fallthru
    _
  // Predicated region
  $region26: #{tpu_custom_call.1} parent=0 // pred_check
    _
  $region27: #{tpu_custom_call.1} parent=0 // pred_check_branch
    %27 = sbr.rel (0) target = $region29
  $region28: #{tpu_custom_call.1} parent=0 // pred_region
    _
  $region29: #{tpu_custom_call.1} parent=0 // pred_fallthru
    _
  %v28 = vld [vmem:[%s0] sm:$0xff]
  %v29 = vld [vmem:[%s1] sm:$0xf]
  %v30 = vld [vmem:[%s2] sm:$0x1]
  %v32 = vlaneseq
  %v33 = vshrl.u32 %v32, 7
  %v34 = vsub.s32 0, %v33
  %v35 = vrot.slane %v30, %v34
  %vm37 = vcmask 31744
  %v39 = vsel %vm37, %v28, 0
  %vm41 = vcmask 1043456
  %v43 = vsel %vm41, %v29, 0
  %45 = vmatprep.subr.mxu0 0.0
  %46 = vmatpush1.msra.mxu0 %v43
  %47 = vmatprep.subr.mxu0 0.0
  %48 = vmatpush1.msra.mxu0 0.0
  %49 = vmatprep.subr.mxu0 0.0
  %50 = vmatpush1.msra.mxu0 0.0
  %51 = vmatprep.subr.mxu0 0.0
  %52 = vmatpush1.msra.mxu0 0.0
  %53 = vmatprep.subr.mxu0 0.0
  %54 = vmatpush1.msra.mxu0 0.0
  %55 = vmatprep.subr.mxu0 0.0
  %56 = vmatpush1.msra.mxu0 0.0
  %57 = vmatprep.subr.mxu0 0.0
  %58 = vmatpush1.msra.mxu0 0.0
  %59 = vmatprep.subr.mxu0 0.0
  %60 = vmatpush1.msra.mxu0 0.0
  %61 = vmatprep.subr.mxu0 0.0
  %62 = vmatpush1.msra.mxu0 0.0
  %63 = vmatprep.subr.mxu0 0.0
  %64 = vmatpush1.msra.mxu0 0.0
  %65 = vmatprep.subr.mxu0 0.0
  %66 = vmatpush1.msra.mxu0 0.0
  %67 = vmatprep.subr.mxu0 0.0
  %68 = vmatpush1.msra.mxu0 0.0
  %69 = vmatprep.subr.mxu0 0.0
  %70 = vmatpush1.msra.mxu0 0.0
  %71 = vmatprep.subr.mxu0 0.0
  %72 = vmatpush1.msra.mxu0 0.0
  %73 = vmatprep.subr.mxu0 0.0
  %74 = vmatpush1.msra.mxu0 0.0
  %75 = vmatprep.subr.mxu0 0.0
  %76 = vmatpush1.msra.mxu0 0.0
  %77 = vmatprep.subr.mxu0 0.0
  %78 = vmatpush1.msra.mxu0 0.0
  %79 = vmatprep.subr.mxu0 0.0
  %80 = vmatpush1.msra.mxu0 0.0
  %81 = vmatprep.subr.mxu0 0.0
  %82 = vmatpush1.msra.mxu0 0.0
  %83 = vmatprep.subr.mxu0 0.0
  %84 = vmatpush1.msra.mxu0 0.0
  %85 = vmatprep.subr.mxu0 0.0
  %86 = vmatpush1.msra.mxu0 0.0
  %87 = vmatprep.subr.mxu0 0.0
  %88 = vmatpush1.msra.mxu0 0.0
  %89 = vmatprep.subr.mxu0 0.0
  %90 = vmatpush1.msra.mxu0 0.0
  %91 = vmatprep.subr.mxu0 0.0
  %92 = vmatpush1.msra.mxu0 0.0
  %93 = vmatprep.subr.mxu0 0.0
  %94 = vmatpush1.msra.mxu0 0.0
  %95 = vmatprep.subr.mxu0 0.0
  %96 = vmatpush1.msra.mxu0 0.0
  %97 = vmatprep.subr.mxu0 0.0
  %98 = vmatpush1.msra.mxu0 0.0
  %99 = vmatprep.subr.mxu0 0.0
  %100 = vmatpush1.msra.mxu0 0.0
  %101 = vmatprep.subr.mxu0 0.0
  %102 = vmatpush1.msra.mxu0 0.0
  %103 = vmatprep.subr.mxu0 0.0
  %104 = vmatpush1.msra.mxu0 0.0
  %105 = vmatprep.subr.mxu0 0.0
  %106 = vmatpush1.msra.mxu0 0.0
  %107 = vmatprep.subr.mxu0 0.0
  %108 = vmatpush1.msra.mxu0 0.0
  %109 = vmatprep.mubr.f32.mxu0 0.0
  %110 = vmatmul.mubr.f32.gmra.mrb[0].mxu0 %v39
  %v111 = vpop.f32.mrb[0].mxu0
  %v112 = vadd.f32 %v35, %v111
  %v113 = vpop.f32.mrb[0].mxu0
  %114 = vdwg.mxu0
  %v115 = vmax.f32 %v112, 0.0
  %v116 = vld [vmem:[%s3] sm:$0xff]
  %v117 = vld [vmem:[%s3 + $0x8] sm:$0xff]
  %v118 = vld [vmem:[%s3 + $0x10] sm:$0xff]
  %v119 = vld [vmem:[%s3 + $0x18] sm:$0xff]
  %v120 = vld [vmem:[%s4] sm:$0x1]
  %v122 = vlaneseq
  %v123 = vshrl.u32 %v122, 7
  %v124 = vsub.s32 0, %v123
  %v125 = vrot.slane %v120, %v124
  %vm127 = vcmask 261120
  %v129 = vsel %vm127, %v115, 0
  %131 = vmatprep.subr.mxu0 0.0
  %132 = vmatpush1.msra.mxu0 %v116
  %133 = vmatprep.subr.mxu0 0.0
  %134 = vmatpush1.msra.mxu0 %v117
  %135 = vmatprep.subr.mxu0 0.0
  %136 = vmatpush1.msra.mxu0 %v118
  %137 = vmatprep.subr.mxu0 0.0
  %138 = vmatpush1.msra.mxu0 %v119
  %139 = vmatprep.subr.mxu0 0.0
  %140 = vmatpush1.msra.mxu0 0.0
  %141 = vmatprep.subr.mxu0 0.0
  %142 = vmatpush1.msra.mxu0 0.0
  %143 = vmatprep.subr.mxu0 0.0
  %144 = vmatpush1.msra.mxu0 0.0
  %145 = vmatprep.subr.mxu0 0.0
  %146 = vmatpush1.msra.mxu0 0.0
  %147 = vmatprep.subr.mxu0 0.0
  %148 = vmatpush1.msra.mxu0 0.0
  %149 = vmatprep.subr.mxu0 0.0
  %150 = vmatpush1.msra.mxu0 0.0
  %151 = vmatprep.subr.mxu0 0.0
  %152 = vmatpush1.msra.mxu0 0.0
  %153 = vmatprep.subr.mxu0 0.0
  %154 = vmatpush1.msra.mxu0 0.0
  %155 = vmatprep.subr.mxu0 0.0
  %156 = vmatpush1.msra.mxu0 0.0
  %157 = vmatprep.subr.mxu0 0.0
  %158 = vmatpush1.msra.mxu0 0.0
  %159 = vmatprep.subr.mxu0 0.0
  %160 = vmatpush1.msra.mxu0 0.0
  %161 = vmatprep.subr.mxu0 0.0
  %162 = vmatpush1.msra.mxu0 0.0
  %163 = vmatprep.subr.mxu0 0.0
  %164 = vmatpush1.msra.mxu0 0.0
  %165 = vmatprep.subr.mxu0 0.0
  %166 = vmatpush1.msra.mxu0 0.0
  %167 = vmatprep.subr.mxu0 0.0
  %168 = vmatpush1.msra.mxu0 0.0
  %169 = vmatprep.subr.mxu0 0.0
  %170 = vmatpush1.msra.mxu0 0.0
  %171 = vmatprep.subr.mxu0 0.0
  %172 = vmatpush1.msra.mxu0 0.0
  %173 = vmatprep.subr.mxu0 0.0
  %174 = vmatpush1.msra.mxu0 0.0
  %175 = vmatprep.subr.mxu0 0.0
  %176 = vmatpush1.msra.mxu0 0.0
  %177 = vmatprep.subr.mxu0 0.0
  %178 = vmatpush1.msra.mxu0 0.0
  %179 = vmatprep.subr.mxu0 0.0
  %180 = vmatpush1.msra.mxu0 0.0
  %181 = vmatprep.subr.mxu0 0.0
  %182 = vmatpush1.msra.mxu0 0.0
  %183 = vmatprep.subr.mxu0 0.0
  %184 = vmatpush1.msra.mxu0 0.0
  %185 = vmatprep.subr.mxu0 0.0
  %186 = vmatpush1.msra.mxu0 0.0
  %187 = vmatprep.subr.mxu0 0.0
  %188 = vmatpush1.msra.mxu0 0.0
  %189 = vmatprep.subr.mxu0 0.0
  %190 = vmatpush1.msra.mxu0 0.0
  %191 = vmatprep.subr.mxu0 0.0
  %192 = vmatpush1.msra.mxu0 0.0
  %193 = vmatprep.subr.mxu0 0.0
  %194 = vmatpush1.msra.mxu0 0.0
  %195 = vmatprep.mubr.f32.mxu0 0.0
  %196 = vmatmul.mubr.f32.gmra.mrb[0].mxu0 %v129
  %v197 = vpop.f32.mrb[0].mxu0
  %v198 = vadd.f32 %v125, %v197
  %v199 = vpop.f32.mrb[0].mxu0
  %200 = vdwg.mxu0
  %v201 = vmax.f32 %v198, 0.0
  %v202 = vld [vmem:[%s5] sm:$0xff]
  %v203 = vld [vmem:[%s5 + $0x8] sm:$0xff]
  %v204 = vld [vmem:[%s5 + $0x10] sm:$0xff]
  %v205 = vld [vmem:[%s5 + $0x18] sm:$0xff]
  %v206 = vld [vmem:[#allocation2] sm:$0x1]
  %v208 = vlaneseq
  %v209 = vshrl.u32 %v208, 7
  %v210 = vsub.s32 0, %v209
  %v211 = vrot.slane %v206, %v210
  %v214 = vsel %vm127, %v201, 0
  %216 = vmatprep.subr.mxu0 0.0
  %217 = vmatpush1.msra.mxu0 %v202
  %218 = vmatprep.subr.mxu0 0.0
  %219 = vmatpush1.msra.mxu0 %v203
  %220 = vmatprep.subr.mxu0 0.0
  %221 = vmatpush1.msra.mxu0 %v204
  %222 = vmatprep.subr.mxu0 0.0
  %223 = vmatpush1.msra.mxu0 %v205
  %224 = vmatprep.subr.mxu0 0.0
  %225 = vmatpush1.msra.mxu0 0.0
  %226 = vmatprep.subr.mxu0 0.0
  %227 = vmatpush1.msra.mxu0 0.0
  %228 = vmatprep.subr.mxu0 0.0
  %229 = vmatpush1.msra.mxu0 0.0
  %230 = vmatprep.subr.mxu0 0.0
  %231 = vmatpush1.msra.mxu0 0.0
  %232 = vmatprep.subr.mxu0 0.0
  %233 = vmatpush1.msra.mxu0 0.0
  %234 = vmatprep.subr.mxu0 0.0
  %235 = vmatpush1.msra.mxu0 0.0
  %236 = vmatprep.subr.mxu0 0.0
  %237 = vmatpush1.msra.mxu0 0.0
  %238 = vmatprep.subr.mxu0 0.0
  %239 = vmatpush1.msra.mxu0 0.0
  %240 = vmatprep.subr.mxu0 0.0
  %241 = vmatpush1.msra.mxu0 0.0
  %242 = vmatprep.subr.mxu0 0.0
  %243 = vmatpush1.msra.mxu0 0.0
  %244 = vmatprep.subr.mxu0 0.0
  %245 = vmatpush1.msra.mxu0 0.0
  %246 = vmatprep.subr.mxu0 0.0
  %247 = vmatpush1.msra.mxu0 0.0
  %248 = vmatprep.subr.mxu0 0.0
  %249 = vmatpush1.msra.mxu0 0.0
  %250 = vmatprep.subr.mxu0 0.0
  %251 = vmatpush1.msra.mxu0 0.0
  %252 = vmatprep.subr.mxu0 0.0
  %253 = vmatpush1.msra.mxu0 0.0
  %254 = vmatprep.subr.mxu0 0.0
  %255 = vmatpush1.msra.mxu0 0.0
  %256 = vmatprep.subr.mxu0 0.0
  %257 = vmatpush1.msra.mxu0 0.0
  %258 = vmatprep.subr.mxu0 0.0
  %259 = vmatpush1.msra.mxu0 0.0
  %260 = vmatprep.subr.mxu0 0.0
  %261 = vmatpush1.msra.mxu0 0.0
  %262 = vmatprep.subr.mxu0 0.0
  %263 = vmatpush1.msra.mxu0 0.0
  %264 = vmatprep.subr.mxu0 0.0
  %265 = vmatpush1.msra.mxu0 0.0
  %266 = vmatprep.subr.mxu0 0.0
  %267 = vmatpush1.msra.mxu0 0.0
  %268 = vmatprep.subr.mxu0 0.0
  %269 = vmatpush1.msra.mxu0 0.0
  %270 = vmatprep.subr.mxu0 0.0
  %271 = vmatpush1.msra.mxu0 0.0
  %272 = vmatprep.subr.mxu0 0.0
  %273 = vmatpush1.msra.mxu0 0.0
  %274 = vmatprep.subr.mxu0 0.0
  %275 = vmatpush1.msra.mxu0 0.0
  %276 = vmatprep.subr.mxu0 0.0
  %277 = vmatpush1.msra.mxu0 0.0
  %278 = vmatprep.subr.mxu0 0.0
  %279 = vmatpush1.msra.mxu0 0.0
  %280 = vmatprep.mubr.f32.mxu0 0.0
  %281 = vmatmul.mubr.f32.gmra.mrb[0].mxu0 %v214
  %v282 = vpop.f32.mrb[0].mxu0
  %v283 = vadd.f32 %v211, %v282
  %v284 = vpop.f32.mrb[0].mxu0
  %285 = vdwg.mxu0
  %vm286 = vcmask 7168
  %287 = vst.msk [vmem:[%s7] sm:$0xff] %vm286, %v283
  // Predicated region
  $region30: #{tpu_custom_call.1} parent=0 // pred_check
    _
  $region31: #{tpu_custom_call.1} parent=0 // pred_check_branch
    %289 = sbr.rel (0) target = $region33
  $region32: #{tpu_custom_call.1} parent=0 // pred_region
    _
  $region33: #{tpu_custom_call.1} parent=0 // pred_fallthru
    _
  // Predicated region
  $region34: #{tpu_custom_call.1} parent=0 // pred_check
    _
  $region35: #{tpu_custom_call.1} parent=0 // pred_check_branch
    %291 = sbr.rel (0) target = $region37
  $region36: #{tpu_custom_call.1} parent=0 // pred_region
    _
  $region37: #{tpu_custom_call.1} parent=0 // pred_fallthru
    _

</llo_original>
